<compile_context>
chip_gen: v5e
topology: v5e:2x2
jax: 0.10.0
libtpu: 0.0.40
codegen_flags: <defaults>
</compile_context>

<pallas_src>
import jax
import jax.numpy as jnp
from jax.experimental import pallas as pl
from jax.experimental.pallas import tpu as pltpu

_ROW_CHUNK = 128   # rows per MXU call -> (128, 128) f32 result block = 16 vregs
_COL_CHUNK = 128   # one lane-tile worth of output columns per store


def _im2col_matmul_kernel(p_ref, w_ref, b_ref, o_ref):
    # p_ref: (M_TILE, K)         bf16 im2col patch rows for this grid step
    # w_ref: (K, COUT_PAD)       bf16 folded weight, layout (kh, kw, cin) x cout
    # b_ref: (1, COUT_PAD)       f32 bias (zero padded to 128-multiple)
    # o_ref: (M_TILE, COUT_PAD)  f32 output rows (lane-dense)
    m_tile, cout_pad = o_ref.shape
    for r in range(0, m_tile, _ROW_CHUNK):          # static, small unroll
        p = p_ref[r:r + _ROW_CHUNK, :]
        for c in range(0, cout_pad, _COL_CHUNK):
            acc = jnp.dot(p, w_ref[:, c:c + _COL_CHUNK],
                          preferred_element_type=jnp.float32)
            o_ref[r:r + _ROW_CHUNK, c:c + _COL_CHUNK] = (
                acc + b_ref[:, c:c + _COL_CHUNK]).astype(o_ref.dtype)


def _pick_m_tile(m_rows):
    # Biggest MXU-friendly row tile that still leaves >= 4 grid steps (pipeline
    # fill + both v7x TensorCores busy); never below 128 rows, never above 512
    # (keeps per-step VMEM small on v7x's smaller VMEM and vreg pressure bounded
    # via the in-kernel 128-row chunking).
    for t in (512, 256, 128):
        if m_rows >= 4 * t:
            return t
    return 128


def simple_conv2d(x_nchw, weight_oihw, bias):
    """Equivalent of F.conv2d(x, weight, bias, padding='same'), stride 1."""
    N, Cin, H, W = x_nchw.shape
    Cout, Cin_w, KH, KW = weight_oihw.shape
    assert Cin == Cin_w
    K = KH * KW * Cin
    cout_pad = ((Cout + 127) // 128) * 128

    # PyTorch 'same' padding split (extra on the high side for even kernels).
    ph_lo, ph_hi = (KH - 1) // 2, KH // 2
    pw_lo, pw_hi = (KW - 1) // 2, KW // 2

    # ---- glue (fused by XLA under jit): layout + padding + im2col + weight fold
    x_nhwc = jnp.transpose(x_nchw, (0, 2, 3, 1))                       # (N,H,W,Cin)
    x_pad = jnp.pad(x_nhwc, ((0, 0), (ph_lo, ph_hi), (pw_lo, pw_hi), (0, 0)))
    patches = jnp.concatenate(
        [x_pad[:, kh:kh + H, kw:kw + W, :]
         for kh in range(KH) for kw in range(KW)], axis=-1)            # (N,H,W,K)
    patches = patches.reshape(N * H * W, K).astype(jnp.bfloat16)

    m_rows = N * H * W
    m_tile = _pick_m_tile(m_rows)
    m_pad = pl.cdiv(m_rows, m_tile) * m_tile
    if m_pad != m_rows:
        patches = jnp.pad(patches, ((0, m_pad - m_rows), (0, 0)))

    # weight (Cout,Cin,KH,KW) -> (KH,KW,Cin,Cout) -> (K,Cout) -> pad cout to 128s
    w_folded = jnp.transpose(weight_oihw, (2, 3, 1, 0)).reshape(K, Cout)
    w_folded = jnp.pad(w_folded, ((0, 0), (0, cout_pad - Cout))).astype(jnp.bfloat16)
    b_padded = jnp.pad(bias.astype(jnp.float32),
                       (0, cout_pad - Cout)).reshape(1, cout_pad)

    out_flat = pl.pallas_call(
        _im2col_matmul_kernel,
        out_shape=jax.ShapeDtypeStruct((m_pad, cout_pad), x_nchw.dtype),
        grid_spec=pltpu.PrefetchScalarGridSpec(
            num_scalar_prefetch=0,
            grid=(m_pad // m_tile,),
            in_specs=[
                pl.BlockSpec((m_tile, K), lambda m: (m, 0)),
                pl.BlockSpec((K, cout_pad), lambda m: (0, 0)),
                pl.BlockSpec((1, cout_pad), lambda m: (0, 0)),
            ],
            out_specs=pl.BlockSpec((m_tile, cout_pad), lambda m: (m, 0)),
        ),
        compiler_params=pltpu.CompilerParams(
            dimension_semantics=("parallel",)),
    )(patches, w_folded, b_padded)

    out = out_flat[:m_rows, :Cout].reshape(N, H, W, Cout)
    # TODO(synk): if the surrounding model can stay NHWC, return `out` directly
    # and drop this transpose (only needed to match the module's NCHW interface).
    return jnp.transpose(out, (0, 3, 1, 2))


def make_params(key, in_channels, out_channels, kernel_size=(3, 3), use_bias=False):
    """xavier_uniform_ weight, zero bias — matches the PyTorch module defaults."""
    KH, KW = kernel_size
    fan_in = in_channels * KH * KW
    fan_out = out_channels * KH * KW
    limit = (6.0 / (fan_in + fan_out)) ** 0.5
    weight = jax.random.uniform(key, (out_channels, in_channels, KH, KW),
                                jnp.float32, minval=-limit, maxval=limit)
    bias = jnp.zeros((out_channels,), jnp.float32)  # zeros regardless of hp.bias
    return weight, bias


if __name__ == "__main__":
    key = jax.random.PRNGKey(0)
    kx, kw = jax.random.split(key)

    N, Cin, H, W = 2, 4, 16, 16
    Cout, KH, KW = 8, 3, 3
    x = jax.random.normal(kx, (N, Cin, H, W), jnp.float32)
    weight, bias = make_params(kw, Cin, Cout, (KH, KW), use_bias=False)

    conv = jax.jit(simple_conv2d)
    out = jax.block_until_ready(conv(x, weight, bias))
    assert out.shape == (N, Cout, H, W) and out.dtype == x.dtype

    pad = (((KH - 1) // 2, KH // 2), ((KW - 1) // 2, KW // 2))

    # Reference with identical numerics (bf16 operands, f32 accumulation).
    ref_bf16 = jax.lax.conv_general_dilated(
        x.astype(jnp.bfloat16), weight.astype(jnp.bfloat16),
        window_strides=(1, 1), padding=pad,
        dimension_numbers=("NCHW", "OIHW", "NCHW"),
        preferred_element_type=jnp.float32) + bias[None, :, None, None]
    assert jnp.allclose(out, ref_bf16, atol=2e-3, rtol=2e-3)

    # Full-precision reference; loose tolerance covers the bf16 operand cast.
    ref_f32 = jax.lax.conv_general_dilated(
        x, weight, window_strides=(1, 1), padding=pad,
        dimension_numbers=("NCHW", "OIHW", "NCHW")) + bias[None, :, None, None]
    assert jnp.allclose(out, ref_f32, atol=5e-2, rtol=5e-2)

    print("KERNEL_OK")
</pallas_src>

<mosaic_0001>
module attributes {stable_mosaic.version = 11 : i64} {
  func.func @_im2col_matmul_kernel(%arg0: i32, %arg1: memref<128x36xbf16, #tpu.memory_space<vmem>>, %arg2: memref<36x128xbf16, #tpu.memory_space<vmem>>, %arg3: memref<1x128xf32, #tpu.memory_space<vmem>>, %arg4: memref<128x128xf32, #tpu.memory_space<vmem>>) attributes {dimension_semantics = [#tpu.dimension_semantics<parallel>], iteration_bounds = array<i64: 4>, scalar_prefetch = 0 : i64, scratch_operands = 0 : i64, tpu.core_type = #tpu.core_type<tc>, window_params = [{transform_indices = @transform_0, window_bounds = array<i64: 128, 36>}, {pipeline_mode = #tpu.pipeline_mode<synchronous>, transform_indices = @transform_1, window_bounds = array<i64: 36, 128>}, {pipeline_mode = #tpu.pipeline_mode<synchronous>, transform_indices = @transform_2, window_bounds = array<i64: 1, 128>}, {transform_indices = @transform_3, window_bounds = array<i64: 128, 128>}]} {
    %c0 = arith.constant 0 : index
    %c0_0 = arith.constant 0 : index
    %0 = vector.load %arg1[%c0, %c0_0] : memref<128x36xbf16, #tpu.memory_space<vmem>>, vector<128x36xbf16>
    %c0_1 = arith.constant 0 : index
    %c0_2 = arith.constant 0 : index
    %1 = vector.load %arg2[%c0_1, %c0_2] : memref<36x128xbf16, #tpu.memory_space<vmem>>, vector<36x128xbf16>
    %cst = arith.constant dense<0.000000e+00> : vector<128x128xf32>
    %2 = tpu.matmul %0, %1, %cst {dimension_numbers = #tpu.dot_dimension_numbers<[1], [0], [0], [1], [0, 0, 1, 1], [], []>} : vector<128x36xbf16>, vector<36x128xbf16>, vector<128x128xf32> -> vector<128x128xf32>
    %c0_3 = arith.constant 0 : index
    %c0_4 = arith.constant 0 : index
    %3 = vector.load %arg3[%c0_3, %c0_4] : memref<1x128xf32, #tpu.memory_space<vmem>>, vector<1x128xf32>
    %4 = vector.broadcast %3 : vector<1x128xf32> to vector<128x128xf32>
    %5 = arith.addf %2, %4 : vector<128x128xf32>
    %c0_5 = arith.constant 0 : index
    %c0_6 = arith.constant 0 : index
    %6 = vector.load %arg4[%c0_5, %c0_6] : memref<128x128xf32, #tpu.memory_space<vmem>>, vector<128x128xf32>
    tpu.vector_store %arg4[%c0_5, %c0_6], %5 {strides = array<i32>} : memref<128x128xf32, #tpu.memory_space<vmem>>, vector<128x128xf32>,
    return
  }
  func.func @transform_0(%arg0: i32) -> (i32, i32) {
    %c0_i32 = arith.constant 0 : i32
    %c0_i32_0 = arith.constant 0 : i32
    return %arg0, %c0_i32 : i32, i32
  }
  func.func @transform_1(%arg0: i32) -> (i32, i32) {
    %c0_i32 = arith.constant 0 : i32
    %c0_i32_0 = arith.constant 0 : i32
    %c0_i32_1 = arith.constant 0 : i32
    return %c0_i32, %c0_i32_0 : i32, i32
  }
  func.func @transform_2(%arg0: i32) -> (i32, i32) {
    %c0_i32 = arith.constant 0 : i32
    %c0_i32_0 = arith.constant 0 : i32
    %c0_i32_1 = arith.constant 0 : i32
    return %c0_i32, %c0_i32_0 : i32, i32
  }
  func.func @transform_3(%arg0: i32) -> (i32, i32) {
    %c0_i32 = arith.constant 0 : i32
    %c0_i32_0 = arith.constant 0 : i32
    return %arg0, %c0_i32 : i32, i32
  }
}

</mosaic_0001>

<llo_original>
// kernel: simple_conv2d.1
$region0: #{simple_conv2d.1}
  #allocation0 [shape = 'u32[]', space=smem, size = 0x4, offset = 0x4, fixed_abs, tag = 'smem constant byte address 0x4 - core index']
  #allocation1 [shape = 'u32[72,128]{1,0:T(1,128)}', space=vmem, size = 0x9000, scoped, tag = 'internal scratch']
  %s0 = inlined_call_operand.vmem [shape: bf16[512,36], index: 0, kind: input, shape index: {}]
  %s1 = inlined_call_operand.vmem [shape: bf16[36,128], index: 1, kind: input, shape index: {}]
  %s2 = inlined_call_operand.vmem [shape: f32[1,128], index: 2, kind: input, shape index: {}]
  %s3 = inlined_call_operand.vmem [shape: f32[512,128], index: 3, kind: output, shape index: {}]
  %s4 = sld [smem:[#allocation0]]
  $region45: #{simple_conv2d.1} parent=0
    _
  %s6 = ssub.s32 1, %s4
  %s7 = scalar_select 0, %s6, %s4
  loop: start=0, step=1, limit=6
  $region2: #{simple_conv2d.1} parent=0 // loop_pre_header
    _
  $region3: #{simple_conv2d.1} parent=0 // loop_header
    %s9 = sphi 0, %s13
    %p10 = scmp.ge.s32.totalorder %s9, 6
    %s19 = sphi 0, %s21
    %s22 = sphi 0, %s19
    %s23 = sphi 0, %s22
    %s39 = sphi 0, %s23
    %s43 = sphi 0, %s43
    %s45 = sphi 0, %s43
    %s46 = sphi 0, %s45
    %s60 = sphi 0, %s46
    %s64 = sphi 0, %s64
    %s66 = sphi 0, %s64
    %s67 = sphi 0, %s66
    %s81 = sphi 0, %s67
    %s87 = sphi 0, %s89
    %s90 = sphi 0, %s87
    %s91 = sphi 0, %s90
    %s107 = sphi 0, %s91
  $region4: #{simple_conv2d.1} parent=0 // loop_header_branch
    %12 = sbr.rel (%p10) target = $region8
  $region5: #{simple_conv2d.1} parent=0 // loop_body
    %s14 = ssub.s32 %s9, 1
    %s15 = ssub.s32 %s9, 2
    %s16 = sadd.s32 %s9, 1
    %s17 = ssub.s32 %s9, %s16
    %p18 = scmp.eq.s32.totalorder %s17, 0
    %s20 = sadd.s32 %s19, 1
    %s21 = scalar_select %p18, %s19, %s20
    %p24 = pneg %p18
    %p25 = scmp.eq.s32.totalorder %s9, 3
    %p26 = por %p24, %p25
    %p27 = scmp.ne.s32.totalorder %s19, %s22
    %p28 = scmp.eq.s32.totalorder %s9, 0
    %p29 = por %p27, %p28
    %p30 = scmp.ne.s32.totalorder %s19, %s22
    %p31 = scmp.eq.s32.totalorder %s14, 3
    %p32 = por %p30, %p31
    %p33 = scmp.ne.s32.totalorder %s22, %s23
    %p34 = scmp.eq.s32.totalorder %s14, 0
    %p35 = por %p33, %p34
    %p36 = scmp.ne.s32.totalorder %s22, %s23
    %p37 = scmp.eq.s32.totalorder %s15, 3
    %p38 = por %p36, %p37
    %p40 = scmp.ne.s32.totalorder %s23, %s39
    %p41 = scmp.eq.s32.totalorder %s15, 0
    %p42 = por %p40, %p41
    %s44 = sadd.s32 %s43, 1
    %p47 = scmp.eq.s32.totalorder %s9, 3
    %p48 = scmp.ne.s32.totalorder %s43, %s45
    %p49 = scmp.eq.s32.totalorder %s9, 0
    %p50 = por %p48, %p49
    %p51 = scmp.ne.s32.totalorder %s43, %s45
    %p52 = scmp.eq.s32.totalorder %s14, 3
    %p53 = por %p51, %p52
    %p54 = scmp.ne.s32.totalorder %s45, %s46
    %p55 = scmp.eq.s32.totalorder %s14, 0
    %p56 = por %p54, %p55
    %p57 = scmp.ne.s32.totalorder %s45, %s46
    %p58 = scmp.eq.s32.totalorder %s15, 3
    %p59 = por %p57, %p58
    %p61 = scmp.ne.s32.totalorder %s46, %s60
    %p62 = scmp.eq.s32.totalorder %s15, 0
    %p63 = por %p61, %p62
    %s65 = sadd.s32 %s64, 1
    %p68 = scmp.eq.s32.totalorder %s9, 3
    %p69 = scmp.ne.s32.totalorder %s64, %s66
    %p70 = scmp.eq.s32.totalorder %s9, 0
    %p71 = por %p69, %p70
    %p72 = scmp.ne.s32.totalorder %s64, %s66
    %p73 = scmp.eq.s32.totalorder %s14, 3
    %p74 = por %p72, %p73
    %p75 = scmp.ne.s32.totalorder %s66, %s67
    %p76 = scmp.eq.s32.totalorder %s14, 0
    %p77 = por %p75, %p76
    %p78 = scmp.ne.s32.totalorder %s66, %s67
    %p79 = scmp.eq.s32.totalorder %s15, 3
    %p80 = por %p78, %p79
    %p82 = scmp.ne.s32.totalorder %s67, %s81
    %p83 = scmp.eq.s32.totalorder %s15, 0
    %p84 = por %p82, %p83
    %s85 = ssub.s32 %s9, %s16
    %p86 = scmp.eq.s32.totalorder %s85, 0
    %s88 = sadd.s32 %s87, 1
    %s89 = scalar_select %p86, %s87, %s88
    %p92 = pneg %p86
    %p93 = scmp.eq.s32.totalorder %s9, 3
    %p94 = por %p92, %p93
    %p95 = scmp.ne.s32.totalorder %s87, %s90
    %p96 = scmp.eq.s32.totalorder %s9, 0
    %p97 = por %p95, %p96
    %p98 = scmp.ne.s32.totalorder %s87, %s90
    %p99 = scmp.eq.s32.totalorder %s14, 3
    %p100 = por %p98, %p99
    %p101 = scmp.ne.s32.totalorder %s90, %s91
    %p102 = scmp.eq.s32.totalorder %s14, 0
    %p103 = por %p101, %p102
    %p104 = scmp.ne.s32.totalorder %s90, %s91
    %p105 = scmp.eq.s32.totalorder %s15, 3
    %p106 = por %p104, %p105
    %p108 = scmp.ne.s32.totalorder %s91, %s107
    %p109 = scmp.eq.s32.totalorder %s15, 0
    %p110 = por %p108, %p109
    %p111 = scmp.le.s32.totalorder 1, %s9
    %p112 = scmp.lt.s32.totalorder %s9, 5
    %p113 = pnand %p111, %p112
    %p114 = pneg %p113
    // Predicated region
    $region9: #{simple_conv2d.1} parent=5 // pred_check
      _
    $region10: #{simple_conv2d.1} parent=5 // pred_check_branch
      %116 = sbr.rel (%p113) target = $region12
    $region11: #{simple_conv2d.1} parent=5 // pred_region
      %s117 = ssub.s32 %s9, 1
      // Predicated region
      $region13: #{simple_conv2d.1} parent=11 // pred_check
        %p118 = pneg %p56
      $region14: #{simple_conv2d.1} parent=11 // pred_check_branch
        %120 = sbr.rel (%p118) target = $region16
      $region15: #{simple_conv2d.1} parent=11 // pred_region
        _
      $region16: #{simple_conv2d.1} parent=11 // pred_fallthru
        _
      // Predicated region
      $region17: #{simple_conv2d.1} parent=11 // pred_check
        %p121 = pneg %p77
      $region18: #{simple_conv2d.1} parent=11 // pred_check_branch
        %123 = sbr.rel (%p121) target = $region20
      $region19: #{simple_conv2d.1} parent=11 // pred_region
        _
      $region20: #{simple_conv2d.1} parent=11 // pred_fallthru
        _
    $region12: #{simple_conv2d.1} parent=5 // pred_fallthru
      _
    %p124 = scmp.lt.s32.totalorder %s9, 4
    // Predicated region
    $region21: #{simple_conv2d.1} parent=5 // pred_check
      %p125 = pneg %p124
    $region22: #{simple_conv2d.1} parent=5 // pred_check_branch
      %127 = sbr.rel (%p125) target = $region24
    $region23: #{simple_conv2d.1} parent=5 // pred_region
      // Predicated region
      $region25: #{simple_conv2d.1} parent=23 // pred_check
        %p128 = pneg %p29
      $region26: #{simple_conv2d.1} parent=23 // pred_check_branch
        %130 = sbr.rel (%p128) target = $region28
      $region27: #{simple_conv2d.1} parent=23 // pred_region
        %s131 = smul.u32 16, %s9
        %p132 = scmp.lt.s32.totalorder %s131, 63
        %s133 = scalar_select %p132, %s131, 63
        %s134 = smul.addr %s133, 4
        %s135 = scalar_lea.vmem %s0, %s134
        %s136 = smul.u32 16, %s9
      $region28: #{simple_conv2d.1} parent=23 // pred_fallthru
        _
    $region24: #{simple_conv2d.1} parent=5 // pred_fallthru
      _
    %p137 = scmp.le.s32.totalorder 1, %s9
    %p138 = scmp.lt.s32.totalorder %s9, 5
    %p139 = pnand %p137, %p138
    %p140 = pneg %p139
    // Predicated region
    $region29: #{simple_conv2d.1} parent=5 // pred_check
      _
    $region30: #{simple_conv2d.1} parent=5 // pred_check_branch
      %142 = sbr.rel (%p139) target = $region32
    $region31: #{simple_conv2d.1} parent=5 // pred_region
      %s143 = ssub.s32 %s9, 1
      %s144 = smul.u32 16, %s14
      %p145 = scmp.lt.s32.totalorder %s144, 63
      %s146 = scalar_select %p145, %s144, 63
      %s147 = smul.addr %s146, 4
      %s148 = scalar_lea.vmem %s0, %s147
      %p149 = pneg %p35
      %p150 = pneg %p32
      %p151 = pneg %p56
      %p152 = pneg %p53
      %p153 = pneg %p77
      %p154 = pneg %p74
      %p155 = pneg %p103
      %p156 = pneg %p100
      %s157 = smul.u32 16, %s14
      %p158 = scmp.lt.s32.totalorder %s157, 63
      %s159 = scalar_select %p158, %s157, 63
      %s160 = smul.addr %s159, 8
      %s161 = scalar_lea.vmem %s3, %s160
      %s162 = smul.u32 16, %s14
      %p163 = scmp.lt.s32.totalorder %s162, 63
      %s164 = scalar_select %p163, %s162, 63
      %s165 = smul.addr %s164, 4
      %s166 = scalar_lea.vmem %s0, %s165
      %s167 = smul.u32 16, %s14
      %s168 = smul.u32 16, %s14
      %p169 = scmp.lt.s32.totalorder %s168, 63
      %s170 = scalar_select %p169, %s168, 63
      %s171 = smul.addr %s170, 8
      %s172 = scalar_lea.vmem %s3, %s171
      %s173 = smul.u32 16, %s14
      %v175 = vld [vmem:[%s166] sm:$0xf]
      %v176 = vld [vmem:[%s166 + $0x4] sm:$0xf]
      %v177 = vld [vmem:[%s166 + $0x8] sm:$0xf]
      %v178 = vld [vmem:[%s166 + $0xc] sm:$0xf]
      %v179 = vld [vmem:[%s166 + $0x10] sm:$0xf]
      %v180 = vld [vmem:[%s166 + $0x14] sm:$0xf]
      %v181 = vld [vmem:[%s166 + $0x18] sm:$0xf]
      %v182 = vld [vmem:[%s166 + $0x1c] sm:$0xf]
      %v183 = vld [vmem:[%s166 + $0x20] sm:$0xf]
      %v184 = vld [vmem:[%s166 + $0x24] sm:$0xf]
      %v185 = vld [vmem:[%s166 + $0x28] sm:$0xf]
      %v186 = vld [vmem:[%s166 + $0x2c] sm:$0xf]
      %v187 = vld [vmem:[%s166 + $0x30] sm:$0xf]
      %v188 = vld [vmem:[%s166 + $0x34] sm:$0xf]
      %v189 = vld [vmem:[%s166 + $0x38] sm:$0xf]
      %v190 = vld [vmem:[%s166 + $0x3c] sm:$0xf]
      %v191 = vld [vmem:[%s1] sm:$0xf]
      %v192 = vld [vmem:[%s1 + $0x4] sm:$0xf]
      %v193 = vld [vmem:[%s1 + $0x8] sm:$0xf]
      %v194 = vld [vmem:[%s1 + $0xc] sm:$0xf]
      %v195 = vld [vmem:[%s1 + $0x10] sm:$0x3]
      %v196 = vld [vmem:[%s2] sm:$0x1]
      %v198 = vperm.slane %v196, 0
      %v216 = vunpack.c.l.b16 %v175
      %v217 = vunpack.c.l.b16 %v176
      %v218 = vunpack.c.l.b16 %v177
      %v219 = vunpack.c.l.b16 %v178
      %v220 = vunpack.c.l.b16 %v179
      %v221 = vunpack.c.l.b16 %v180
      %v222 = vunpack.c.l.b16 %v181
      %v223 = vunpack.c.l.b16 %v182
      %v224 = vunpack.c.l.b16 %v183
      %v225 = vunpack.c.l.b16 %v184
      %v226 = vunpack.c.l.b16 %v185
      %v227 = vunpack.c.l.b16 %v186
      %v228 = vunpack.c.l.b16 %v187
      %v229 = vunpack.c.l.b16 %v188
      %v230 = vunpack.c.l.b16 %v189
      %v231 = vunpack.c.l.b16 %v190
      %v232 = vpack.c.b16 %v217, %v216
      %v233 = vpack.c.b16 %v219, %v218
      %v234 = vpack.c.b16 %v221, %v220
      %v235 = vpack.c.b16 %v223, %v222
      %v236 = vpack.c.b16 %v225, %v224
      %v237 = vpack.c.b16 %v227, %v226
      %v238 = vpack.c.b16 %v229, %v228
      %v239 = vpack.c.b16 %v231, %v230
      %v245 = vunpack.c.l.b16 %v191
      %v246 = vunpack.c.l.b16 %v192
      %v247 = vunpack.c.l.b16 %v193
      %v248 = vunpack.c.l.b16 %v194
      %v249 = vunpack.c.l.b16 %v195
      %v250 = vpack.c.b16 %v246, %v245
      %v251 = vpack.c.b16 %v248, %v247
      %v252 = vpack.c.b16 %v249, %v249
      %vm255 = vcmask 293888
      %v257 = vsel %vm255, %v232, 0
      %v260 = vsel %vm255, %v233, 0
      %v263 = vsel %vm255, %v234, 0
      %v266 = vsel %vm255, %v235, 0
      %v269 = vsel %vm255, %v236, 0
      %v272 = vsel %vm255, %v237, 0
      %v275 = vsel %vm255, %v238, 0
      %v278 = vsel %vm255, %v239, 0
      %vm280 = vcmask 1041408
      %v282 = vsel %vm280, %v252, 0
      %284 = vmatpush.bf16.msra.mxu0 0
      %285 = vmatpush.bf16.msra.mxu0 0
      %286 = vmatpush.bf16.msra.mxu0 0
      %287 = vmatpush.bf16.msra.mxu0 0
      %288 = vmatpush.bf16.msra.mxu0 0
      %289 = vmatpush.bf16.msra.mxu0 %v282
      %290 = vmatpush.bf16.msra.mxu0 %v251
      %291 = vmatpush.bf16.msra.mxu0 %v250
      %292 = vmatmul.bf16.gmra.mxu0 %v257
      %v293 = vpop.f32.mrf.mxu0
      %v294 = vadd.f32 %v198, %v293
      %v295 = vpop.f32.mrf.mxu0
      %v296 = vadd.f32 %v198, %v295
      %297 = vmatmul.bf16.gmra.mxu0 %v260
      %v298 = vpop.f32.mrf.mxu0
      %v299 = vadd.f32 %v198, %v298
      %v300 = vpop.f32.mrf.mxu0
      %v301 = vadd.f32 %v198, %v300
      %302 = vmatmul.bf16.gmra.mxu0 %v263
      %v303 = vpop.f32.mrf.mxu0
      %v304 = vadd.f32 %v198, %v303
      %v305 = vpop.f32.mrf.mxu0
      %v306 = vadd.f32 %v198, %v305
      %307 = vmatmul.bf16.gmra.mxu0 %v266
      %v308 = vpop.f32.mrf.mxu0
      %v309 = vadd.f32 %v198, %v308
      %v310 = vpop.f32.mrf.mxu0
      %v311 = vadd.f32 %v198, %v310
      %312 = vmatmul.bf16.gmra.mxu0 %v269
      %v313 = vpop.f32.mrf.mxu0
      %v314 = vadd.f32 %v198, %v313
      %v315 = vpop.f32.mrf.mxu0
      %v316 = vadd.f32 %v198, %v315
      %317 = vmatmul.bf16.gmra.mxu0 %v272
      %v318 = vpop.f32.mrf.mxu0
      %v319 = vadd.f32 %v198, %v318
      %v320 = vpop.f32.mrf.mxu0
      %v321 = vadd.f32 %v198, %v320
      %322 = vmatmul.bf16.gmra.mxu0 %v275
      %v323 = vpop.f32.mrf.mxu0
      %v324 = vadd.f32 %v198, %v323
      %v325 = vpop.f32.mrf.mxu0
      %v326 = vadd.f32 %v198, %v325
      %327 = vmatmul.bf16.gmra.mxu0 %v278
      %v328 = vpop.f32.mrf.mxu0
      %v329 = vadd.f32 %v198, %v328
      %v330 = vpop.f32.mrf.mxu0
      %v331 = vadd.f32 %v198, %v330
      %332 = vdwg.mxu0
      %333 = vst [vmem:[%s172] sm:$0xff] %v294
      %334 = vst [vmem:[%s172 + $0x8] sm:$0xff] %v296
      %335 = vst [vmem:[%s172 + $0x10] sm:$0xff] %v299
      %336 = vst [vmem:[%s172 + $0x18] sm:$0xff] %v301
      %337 = vst [vmem:[%s172 + $0x20] sm:$0xff] %v304
      %338 = vst [vmem:[%s172 + $0x28] sm:$0xff] %v306
      %339 = vst [vmem:[%s172 + $0x30] sm:$0xff] %v309
      %340 = vst [vmem:[%s172 + $0x38] sm:$0xff] %v311
      %341 = vst [vmem:[%s172 + $0x40] sm:$0xff] %v314
      %342 = vst [vmem:[%s172 + $0x48] sm:$0xff] %v316
      %343 = vst [vmem:[%s172 + $0x50] sm:$0xff] %v319
      %344 = vst [vmem:[%s172 + $0x58] sm:$0xff] %v321
      %345 = vst [vmem:[%s172 + $0x60] sm:$0xff] %v324
      %346 = vst [vmem:[%s172 + $0x68] sm:$0xff] %v326
      %347 = vst [vmem:[%s172 + $0x70] sm:$0xff] %v329
      %348 = vst [vmem:[%s172 + $0x78] sm:$0xff] %v331
      %s349 = smul.u32 16, %s14
      %p350 = scmp.lt.s32.totalorder %s349, 63
      %s351 = scalar_select %p350, %s349, 63
      %s352 = smul.addr %s351, 8
      %s353 = scalar_lea.vmem %s3, %s352
      // Predicated region
      $region33: #{simple_conv2d.1} parent=31 // pred_check
        %p354 = pneg %p100
      $region34: #{simple_conv2d.1} parent=31 // pred_check_branch
        %356 = sbr.rel (%p354) target = $region36
      $region35: #{simple_conv2d.1} parent=31 // pred_region
        %s357 = smul.u32 16, %s14
      $region36: #{simple_conv2d.1} parent=31 // pred_fallthru
        _
    $region32: #{simple_conv2d.1} parent=5 // pred_fallthru
      _
    %p358 = scmp.le.s32.totalorder 2, %s9
    // Predicated region
    $region37: #{simple_conv2d.1} parent=5 // pred_check
      %p359 = pneg %p358
    $region38: #{simple_conv2d.1} parent=5 // pred_check_branch
      %361 = sbr.rel (%p359) target = $region40
    $region39: #{simple_conv2d.1} parent=5 // pred_region
      %s362 = ssub.s32 %s9, 2
      // Predicated region
      $region41: #{simple_conv2d.1} parent=39 // pred_check
        %p363 = pneg %p106
      $region42: #{simple_conv2d.1} parent=39 // pred_check_branch
        %365 = sbr.rel (%p363) target = $region44
      $region43: #{simple_conv2d.1} parent=39 // pred_region
        %s366 = smul.u32 16, %s15
        %p367 = scmp.lt.s32.totalorder %s366, 63
        %s368 = scalar_select %p367, %s366, 63
        %s369 = smul.addr %s368, 8
        %s370 = scalar_lea.vmem %s3, %s369
      $region44: #{simple_conv2d.1} parent=39 // pred_fallthru
        _
    $region40: #{simple_conv2d.1} parent=5 // pred_fallthru
      _
  $region6: #{simple_conv2d.1} parent=0 // loop_footer
    %s13 = sadd.s32 1, %s9
  $region7: #{simple_conv2d.1} parent=0 // loop_footer_branch
    %8 = sbr.rel target = $region3
  $region8: #{simple_conv2d.1} parent=0 // loop_exit
    _

</llo_original>
